<compile_context>
chip_gen: v7x
topology: tpu7x:2x2x1
jax: 0.10.0
libtpu: 0.0.40
codegen_flags: <defaults>
</compile_context>

<pallas_src>
import functools

import jax
import jax.numpy as jnp
from jax import lax
from jax.experimental import pallas as pl
from jax.experimental.pallas import tpu as pltpu

BF16 = jnp.bfloat16
_VMEM_LIMIT = 32 * 1024 * 1024   # explicit scoped-VMEM limit, safe on v5e/v6e/v7x

# Architecture constants of PictureProcessor (fixed in the PyTorch module).
_K1, _S1 = 8, 4
_K2, _S2 = 4, 2
_K3, _S3 = 3, 1


# ----------------------------------------------------------------------------
# Fused picture-path kernel: conv1 -> conv2 -> conv3 -> dense2 -> head
# (one grid step per image; everything stays on-chip)
# ----------------------------------------------------------------------------
def _picture_policy_kernel(x_ref, w1_ref, b1_ref, w2_ref, b2_ref, w3_ref, b3_ref,
                           wd2_ref, bd2_ref, wh_ref, bh_ref, o_ref, a1_ref,
                           *, oh1, ow1):
    oc1 = w1_ref.shape[2]                      # 32
    oc2 = w2_ref.shape[2]                      # 64
    oc3 = w3_ref.shape[2]                      # 64
    fh2 = oh1 - _K2 + 1                        # stride-1 overcompute extent (5)
    fw2 = ow1 - _K2 + 1
    oh2 = (oh1 - _K2) // _S2 + 1               # true conv2 output (3)
    ow2 = (ow1 - _K2) // _S2 + 1

    # ---- conv1: 8x8 stride-4 conv == 2x2 stride-1 conv over 4x4x3 cells -----
    xc = x_ref[...].astype(BF16)               # (1, ch, cw, 48)
    acc1 = jnp.zeros((oh1 * ow1, oc1), jnp.float32)
    for bi in range(2):
        for bj in range(2):
            patch = xc[0, bi:bi + oh1, bj:bj + ow1, :].reshape(oh1 * ow1, -1)
            acc1 = acc1 + jnp.dot(patch, w1_ref[bi * 2 + bj],
                                  preferred_element_type=jnp.float32)
    a1 = jnp.maximum(acc1 + b1_ref[...], 0.0)          # (oh1*ow1, 32) f32
    a1_ref[...] = a1.reshape(oh1, ow1, oc1)            # spatial scratch for conv2

    # ---- conv2: 4x4 stride-2, computed stride-1 then subsampled -------------
    acc2 = jnp.zeros((fh2 * fw2, oc2), jnp.float32)
    for kh in range(_K2):
        for kw in range(_K2):
            win = a1_ref[kh:kh + fh2, kw:kw + fw2, :].astype(BF16)
            acc2 = acc2 + jnp.dot(win.reshape(fh2 * fw2, oc1),
                                  w2_ref[kh * _K2 + kw],
                                  preferred_element_type=jnp.float32)
    a2f = jnp.maximum(acc2 + b2_ref[...], 0.0)          # (fh2*fw2, 64) f32
    rows = []                                           # keep stride-2 positions
    for i in range(oh2):
        for j in range(ow2):
            r = (_S2 * i) * fw2 + (_S2 * j)
            rows.append(a2f[r:r + 1, :])
    a2 = jnp.concatenate(rows, axis=0).astype(BF16)     # (oh2*ow2, 64)

    # ---- conv3: 3x3 stride-1 -> 1x1 spatial (full contraction over 9 rows) --
    acc3 = jnp.zeros((1, oc3), jnp.float32)
    for k in range(w3_ref.shape[0]):
        acc3 = acc3 + jnp.dot(a2[k:k + 1, :], w3_ref[k],
                              preferred_element_type=jnp.float32)
    # PictureProcessor ends with ReLU; Policy's extra ReLU is idempotent.
    feat = jnp.maximum(acc3 + b3_ref[...], 0.0).astype(BF16)   # (1, 64)

    # ---- dense2 -> ReLU -> head ---------------------------------------------
    h = jnp.dot(feat, wd2_ref[...], preferred_element_type=jnp.float32)
    h = jnp.maximum(h + bd2_ref[...], 0.0).astype(BF16)
    y = jnp.dot(h, wh_ref[...], preferred_element_type=jnp.float32)
    o_ref[...] = (y + bh_ref[...]).astype(o_ref.dtype)


def policy_forward_picture(state_nchw, kp):
    """Policy forward for picture states.  state_nchw: (B, 3, H, W) f32."""
    b, c, h, w = state_nchw.shape
    assert c == 3 and h % _S1 == 0 and w % _S1 == 0
    ch, cw = h // _S1, w // _S1
    oh1, ow1 = ch - 1, cw - 1
    # Single XLA copy: NCHW -> (B, ch, cw, 4*4*3) cell layout (feature = wi,wj,c).
    x_cells = state_nchw.reshape(b, c, ch, _S1, cw, _S1)
    x_cells = jnp.transpose(x_cells, (0, 2, 4, 3, 5, 1)).reshape(b, ch, cw, _S1 * _S1 * c)

    n_out = kp["w3"].shape[1]
    kern = functools.partial(_picture_policy_kernel, oh1=oh1, ow1=ow1)
    return pl.pallas_call(
        kern,
        out_shape=jax.ShapeDtypeStruct((b, n_out), jnp.float32),
        grid_spec=pltpu.PrefetchScalarGridSpec(
            num_scalar_prefetch=0,
            grid=(b,),
            in_specs=[
                pl.BlockSpec((1, ch, cw, _S1 * _S1 * c), lambda i: (i, 0, 0, 0)),
                pl.BlockSpec(kp["c1_w"].shape, lambda i: (0, 0, 0)),
                pl.BlockSpec(kp["c1_b"].shape, lambda i: (0, 0)),
                pl.BlockSpec(kp["c2_w"].shape, lambda i: (0, 0, 0)),
                pl.BlockSpec(kp["c2_b"].shape, lambda i: (0, 0)),
                pl.BlockSpec(kp["c3_w"].shape, lambda i: (0, 0, 0)),
                pl.BlockSpec(kp["c3_b"].shape, lambda i: (0, 0)),
                pl.BlockSpec(kp["w2"].shape, lambda i: (0, 0)),
                pl.BlockSpec(kp["b2"].shape, lambda i: (0, 0)),
                pl.BlockSpec(kp["w3"].shape, lambda i: (0, 0)),
                pl.BlockSpec(kp["b3"].shape, lambda i: (0, 0)),
            ],
            out_specs=pl.BlockSpec((1, n_out), lambda i: (i, 0)),
            scratch_shapes=[pltpu.VMEM((oh1, ow1, kp["c1_w"].shape[2]), jnp.float32)],
        ),
        compiler_params=pltpu.CompilerParams(
            dimension_semantics=("parallel",),
            vmem_limit_bytes=_VMEM_LIMIT),
    )(x_cells, kp["c1_w"], kp["c1_b"], kp["c2_w"], kp["c2_b"],
      kp["c3_w"], kp["c3_b"], kp["w2"], kp["b2"], kp["w3"], kp["b3"])


# ----------------------------------------------------------------------------
# Fused flat-state kernel: relu(x@W1+b1) -> relu(.@W2+b2) -> .@W3+b3
# ----------------------------------------------------------------------------
def _mlp3_kernel(x_ref, w1_ref, b1_ref, w2_ref, b2_ref, w3_ref, b3_ref, o_ref):
    h = jnp.dot(x_ref[...].astype(BF16), w1_ref[...],
                preferred_element_type=jnp.float32)
    h = jnp.maximum(h + b1_ref[...], 0.0)
    h = jnp.dot(h.astype(BF16), w2_ref[...], preferred_element_type=jnp.float32)
    h = jnp.maximum(h + b2_ref[...], 0.0)
    y = jnp.dot(h.astype(BF16), w3_ref[...], preferred_element_type=jnp.float32)
    o_ref[...] = (y + b3_ref[...]).astype(o_ref.dtype)


def policy_forward_vector(state, kp):
    """Policy forward for flat states.  Purely launch-bound at small batch;
    batch many states before calling to amortize the fixed per-call cost."""
    b = state.shape[0]
    n_out = kp["w3"].shape[1]
    vmem = pl.BlockSpec(memory_space=pltpu.MemorySpace.VMEM)
    return pl.pallas_call(
        _mlp3_kernel,
        out_shape=jax.ShapeDtypeStruct((b, n_out), jnp.float32),
        in_specs=[vmem] * 7,
        out_specs=vmem,
        compiler_params=pltpu.CompilerParams(vmem_limit_bytes=_VMEM_LIMIT),
    )(state, kp["w1"], kp["b1"], kp["w2"], kp["b2"], kp["w3"], kp["b3"])


# ----------------------------------------------------------------------------
# Parameter init (xavier_uniform weights, zero bias) + kernel-ready prep
# ----------------------------------------------------------------------------
def _xavier(key, shape, fan_in, fan_out):
    limit = (6.0 / (fan_in + fan_out)) ** 0.5
    return jax.random.uniform(key, shape, jnp.float32, -limit, limit)


def init_policy_vector(key, state_size, action_size, hidden_size):
    k1, k2, k3 = jax.random.split(key, 3)
    return {
        "w1": _xavier(k1, (state_size, hidden_size), state_size, hidden_size),
        "b1": jnp.zeros((hidden_size,), jnp.float32),
        "w2": _xavier(k2, (hidden_size, hidden_size), hidden_size, hidden_size),
        "b2": jnp.zeros((hidden_size,), jnp.float32),
        "w3": _xavier(k3, (hidden_size, 2 * action_size), hidden_size, 2 * action_size),
        "b3": jnp.zeros((2 * action_size,), jnp.float32),
    }


def init_policy_picture(key, state_size_chw, action_size, hidden_size):
    c, h, w = state_size_chw
    assert c == 3
    k1, k2, k3, k4, k5 = jax.random.split(key, 5)
    p = {
        "c1_w": _xavier(k1, (32, 3, 8, 8), 3 * 8 * 8, 32 * 8 * 8),
        "c1_b": jnp.zeros((32,), jnp.float32),
        "c2_w": _xavier(k2, (64, 32, 4, 4), 32 * 4 * 4, 64 * 4 * 4),
        "c2_b": jnp.zeros((64,), jnp.float32),
        "c3_w": _xavier(k3, (64, 64, 3, 3), 64 * 3 * 3, 64 * 3 * 3),
        "c3_b": jnp.zeros((64,), jnp.float32),
    }
    # get_out_shape_for_in: conv shape arithmetic
    oh1 = (h - 8) // 4 + 1; ow1 = (w - 8) // 4 + 1
    oh2 = (oh1 - 4) // 2 + 1; ow2 = (ow1 - 4) // 2 + 1
    oh3 = oh2 - 3 + 1; ow3 = ow2 - 3 + 1
    feat = 64 * oh3 * ow3
    p["feat_chw"] = (64, oh3, ow3)
    p["w2"] = _xavier(k4, (feat, hidden_size), feat, hidden_size)
    p["b2"] = jnp.zeros((hidden_size,), jnp.float32)
    p["w3"] = _xavier(k5, (hidden_size, 2 * action_size), hidden_size, 2 * action_size)
    p["b3"] = jnp.zeros((2 * action_size,), jnp.float32)
    return p


def prepare_policy_vector(p):
    """Kernel-ready weights: bf16 for the MXU, biases as (1, N) f32 rows."""
    return {
        "w1": p["w1"].astype(BF16), "b1": p["b1"].reshape(1, -1),
        "w2": p["w2"].astype(BF16), "b2": p["b2"].reshape(1, -1),
        "w3": p["w3"].astype(BF16), "b3": p["b3"].reshape(1, -1),
    }


def prepare_policy_picture(p):
    """Kernel-ready weights for the fused picture kernel.

    conv1: (4, 4*4*3, 32)  -- 2x2 cell-conv blocks, rows ordered (wi, wj, c)
    conv2: (16, 32, 64)    -- per-(kh,kw) slices, rows = input channels
    conv3: (9, 64, 64)     -- per-(kh,kw) slices
    All matmul operands bf16; biases (1, N) f32.
    """
    c1 = p["c1_w"]                                          # (32, 3, 8, 8)
    oc1, ci1 = c1.shape[0], c1.shape[1]
    w1c = (c1.reshape(oc1, ci1, 2, _S1, 2, _S1)             # (oc, c, bi, wi, bj, wj)
             .transpose(2, 4, 3, 5, 1, 0)                   # (bi, bj, wi, wj, c, oc)
             .reshape(4, _S1 * _S1 * ci1, oc1).astype(BF16))
    c2 = p["c2_w"]                                          # (64, 32, 4, 4)
    w2c = (c2.transpose(2, 3, 1, 0)
             .reshape(_K2 * _K2, c2.shape[1], c2.shape[0]).astype(BF16))
    c3 = p["c3_w"]                                          # (64, 64, 3, 3)
    w3c = (c3.transpose(2, 3, 1, 0)
             .reshape(_K3 * _K3, c3.shape[1], c3.shape[0]).astype(BF16))

    oc3, oh3, ow3 = p["feat_chw"]
    assert oh3 == 1 and ow3 == 1, "fused kernel assumes conv3 output is 1x1 spatial"
    # TODO(synk): for inputs where conv3's output is larger than 1x1 spatial, a
    # general conv3 loop plus the NCHW-flatten row permutation of dense2 would
    # be needed inside the fused kernel.

    return {
        "c1_w": w1c, "c1_b": p["c1_b"].reshape(1, -1),
        "c2_w": w2c, "c2_b": p["c2_b"].reshape(1, -1),
        "c3_w": w3c, "c3_b": p["c3_b"].reshape(1, -1),
        "w2": p["w2"].astype(BF16), "b2": p["b2"].reshape(1, -1),
        "w3": p["w3"].astype(BF16), "b3": p["b3"].reshape(1, -1),
    }


# ----------------------------------------------------------------------------
# Pure-JAX references (f32 = PyTorch semantics; bf16-matched = kernel math)
# ----------------------------------------------------------------------------
def _dot_bf16(a, b):
    return jnp.dot(a.astype(BF16), b.astype(BF16), preferred_element_type=jnp.float32)


def _ref_policy_vector_f32(x, p):
    h = jax.nn.relu(x @ p["w1"] + p["b1"])
    h = jax.nn.relu(h @ p["w2"] + p["b2"])
    return h @ p["w3"] + p["b3"]


def _ref_policy_vector_bf16(x, p):
    h = jax.nn.relu(_dot_bf16(x, p["w1"]) + p["b1"])
    h = jax.nn.relu(_dot_bf16(h, p["w2"]) + p["b2"])
    return _dot_bf16(h, p["w3"]) + p["b3"]


def _ref_conv_f32(x_nchw, w, b, stride):
    y = lax.conv_general_dilated(x_nchw, w, (stride, stride), "VALID",
                                 dimension_numbers=("NCHW", "OIHW", "NCHW"))
    return jax.nn.relu(y + b.reshape(1, -1, 1, 1))


def _ref_policy_picture_f32(x_nchw, p):
    x = _ref_conv_f32(x_nchw, p["c1_w"], p["c1_b"], 4)
    x = _ref_conv_f32(x, p["c2_w"], p["c2_b"], 2)
    x = _ref_conv_f32(x, p["c3_w"], p["c3_b"], 1)
    feat = x.reshape(x.shape[0], -1)
    h = jax.nn.relu(feat @ p["w2"] + p["b2"])
    return h @ p["w3"] + p["b3"]


def _ref_conv_bf16(x_bf16, w, b, stride):
    y = lax.conv_general_dilated(x_bf16, w.astype(BF16), (stride, stride), "VALID",
                                 dimension_numbers=("NCHW", "OIHW", "NCHW"),
                                 preferred_element_type=jnp.float32)
    return jax.nn.relu(y + b.reshape(1, -1, 1, 1)).astype(BF16)


def _ref_policy_picture_bf16(x_nchw, p):
    x = _ref_conv_bf16(x_nchw.astype(BF16), p["c1_w"], p["c1_b"], 4)
    x = _ref_conv_bf16(x, p["c2_w"], p["c2_b"], 2)
    x = _ref_conv_bf16(x, p["c3_w"], p["c3_b"], 1)
    feat = x.reshape(x.shape[0], -1)
    h = jax.nn.relu(_dot_bf16(feat, p["w2"]) + p["b2"])
    return _dot_bf16(h, p["w3"]) + p["b3"]


# ----------------------------------------------------------------------------
if __name__ == "__main__":
    key = jax.random.PRNGKey(0)
    k_pv, k_pp, k_xv, k_xp = jax.random.split(key, 4)

    batch, hidden, action = 2, 32, 3

    # --- flat-state path: state_size = 8 (int) ---
    state_size = 8
    params_v = init_policy_vector(k_pv, state_size, action, hidden)
    kparams_v = prepare_policy_vector(params_v)
    x_vec = jax.random.normal(k_xv, (batch, state_size), jnp.float32)
    out_v = jax.block_until_ready(policy_forward_vector(x_vec, kparams_v))
    assert out_v.shape == (batch, 2 * action)
    ref_v_bf16 = _ref_policy_vector_bf16(x_vec, params_v)
    ref_v_f32 = _ref_policy_vector_f32(x_vec, params_v)
    assert jnp.allclose(out_v, ref_v_bf16, atol=5e-3, rtol=5e-3), "vector: mismatch vs bf16-matched ref"
    assert jnp.allclose(out_v, ref_v_f32, atol=1e-1, rtol=1e-1), "vector: drift vs f32 ref"

    # --- picture-state path: state_size = (3, 36, 36) (NCHW input) ---
    state_chw = (3, 36, 36)
    params_p = init_policy_picture(k_pp, state_chw, action, hidden)
    kparams_p = prepare_policy_picture(params_p)
    x_img = jax.random.normal(k_xp, (batch,) + state_chw, jnp.float32)
    out_p = jax.block_until_ready(policy_forward_picture(x_img, kparams_p))
    assert out_p.shape == (batch, 2 * action)
    ref_p_bf16 = _ref_policy_picture_bf16(x_img, params_p)
    ref_p_f32 = _ref_policy_picture_f32(x_img, params_p)
    assert jnp.allclose(out_p, ref_p_bf16, atol=1e-2, rtol=1e-2), "picture: mismatch vs bf16-matched ref"
    assert jnp.allclose(out_p, ref_p_f32, atol=1e-1, rtol=1e-1), "picture: drift vs f32 ref"

    print("KERNEL_OK")
</pallas_src>

<mosaic_0001>
module attributes {stable_mosaic.version = 11 : i64} {
  func.func @_mlp3_kernel(%arg0: memref<2x8xf32, #tpu.memory_space<vmem>>, %arg1: memref<8x32xbf16, #tpu.memory_space<vmem>>, %arg2: memref<1x32xf32, #tpu.memory_space<vmem>>, %arg3: memref<32x32xbf16, #tpu.memory_space<vmem>>, %arg4: memref<1x32xf32, #tpu.memory_space<vmem>>, %arg5: memref<32x6xbf16, #tpu.memory_space<vmem>>, %arg6: memref<1x6xf32, #tpu.memory_space<vmem>>, %arg7: memref<2x6xf32, #tpu.memory_space<vmem>>) attributes {dimension_semantics = [], scalar_prefetch = 0 : i64, scratch_operands = 0 : i64, tpu.core_type = #tpu.core_type<tc>} {
    %c0 = arith.constant 0 : index
    %c0_0 = arith.constant 0 : index
    %0 = vector.load %arg0[%c0, %c0_0] : memref<2x8xf32, #tpu.memory_space<vmem>>, vector<2x8xf32>
    %1 = arith.truncf %0 : vector<2x8xf32> to vector<2x8xbf16>
    %c0_1 = arith.constant 0 : index
    %c0_2 = arith.constant 0 : index
    %2 = vector.load %arg1[%c0_1, %c0_2] : memref<8x32xbf16, #tpu.memory_space<vmem>>, vector<8x32xbf16>
    %cst = arith.constant dense<0.000000e+00> : vector<2x32xf32>
    %3 = tpu.matmul %1, %2, %cst {dimension_numbers = #tpu.dot_dimension_numbers<[1], [0], [0], [1], [0, 0, 1, 1], [], []>} : vector<2x8xbf16>, vector<8x32xbf16>, vector<2x32xf32> -> vector<2x32xf32>
    %c0_3 = arith.constant 0 : index
    %c0_4 = arith.constant 0 : index
    %4 = vector.load %arg2[%c0_3, %c0_4] : memref<1x32xf32, #tpu.memory_space<vmem>>, vector<1x32xf32>
    %5 = vector.broadcast %4 : vector<1x32xf32> to vector<2x32xf32>
    %6 = arith.addf %3, %5 : vector<2x32xf32>
    %cst_5 = arith.constant 0.000000e+00 : f32
    %7 = vector.broadcast %cst_5 : f32 to vector<2x32xf32>
    %8 = arith.maximumf %6, %7 : vector<2x32xf32>
    %9 = arith.truncf %8 : vector<2x32xf32> to vector<2x32xbf16>
    %c0_6 = arith.constant 0 : index
    %c0_7 = arith.constant 0 : index
    %10 = vector.load %arg3[%c0_6, %c0_7] : memref<32x32xbf16, #tpu.memory_space<vmem>>, vector<32x32xbf16>
    %cst_8 = arith.constant dense<0.000000e+00> : vector<2x32xf32>
    %11 = tpu.matmul %9, %10, %cst_8 {dimension_numbers = #tpu.dot_dimension_numbers<[1], [0], [0], [1], [0, 0, 1, 1], [], []>} : vector<2x32xbf16>, vector<32x32xbf16>, vector<2x32xf32> -> vector<2x32xf32>
    %c0_9 = arith.constant 0 : index
    %c0_10 = arith.constant 0 : index
    %12 = vector.load %arg4[%c0_9, %c0_10] : memref<1x32xf32, #tpu.memory_space<vmem>>, vector<1x32xf32>
    %13 = vector.broadcast %12 : vector<1x32xf32> to vector<2x32xf32>
    %14 = arith.addf %11, %13 : vector<2x32xf32>
    %cst_11 = arith.constant 0.000000e+00 : f32
    %15 = vector.broadcast %cst_11 : f32 to vector<2x32xf32>
    %16 = arith.maximumf %14, %15 : vector<2x32xf32>
    %17 = arith.truncf %16 : vector<2x32xf32> to vector<2x32xbf16>
    %c0_12 = arith.constant 0 : index
    %c0_13 = arith.constant 0 : index
    %18 = vector.load %arg5[%c0_12, %c0_13] : memref<32x6xbf16, #tpu.memory_space<vmem>>, vector<32x6xbf16>
    %cst_14 = arith.constant dense<0.000000e+00> : vector<2x6xf32>
    %19 = tpu.matmul %17, %18, %cst_14 {dimension_numbers = #tpu.dot_dimension_numbers<[1], [0], [0], [1], [0, 0, 1, 1], [], []>} : vector<2x32xbf16>, vector<32x6xbf16>, vector<2x6xf32> -> vector<2x6xf32>
    %c0_15 = arith.constant 0 : index
    %c0_16 = arith.constant 0 : index
    %20 = vector.load %arg6[%c0_15, %c0_16] : memref<1x6xf32, #tpu.memory_space<vmem>>, vector<1x6xf32>
    %21 = vector.broadcast %20 : vector<1x6xf32> to vector<2x6xf32>
    %22 = arith.addf %19, %21 : vector<2x6xf32>
    %c0_17 = arith.constant 0 : index
    %c0_18 = arith.constant 0 : index
    %23 = vector.load %arg7[%c0_17, %c0_18] : memref<2x6xf32, #tpu.memory_space<vmem>>, vector<2x6xf32>
    tpu.vector_store %arg7[%c0_17, %c0_18], %22 {strides = array<i32>} : memref<2x6xf32, #tpu.memory_space<vmem>>, vector<2x6xf32>,
    return
  }
}

</mosaic_0001>

<llo_original>
// kernel: tpu_custom_call.1
$region0: #{tpu_custom_call.1}
  #allocation0 [shape = 'u32[]', space=smem, size = 0x4, offset = 0x4, fixed_abs, tag = 'smem constant byte address 0x4 - core index']
  #allocation1 [shape = 'u32[144,128]{1,0:T(1,128)}', space=vmem, size = 0x12000, scoped, tag = 'internal scratch']
  %s0 = inlined_call_operand.vmem [shape: f32[2,8], index: 0, kind: input, shape index: {}]
  %s1 = inlined_call_operand.vmem [shape: bf16[8,32], index: 1, kind: input, shape index: {}]
  %s2 = inlined_call_operand.vmem [shape: f32[1,32], index: 2, kind: input, shape index: {}]
  %s3 = inlined_call_operand.vmem [shape: bf16[32,32], index: 3, kind: input, shape index: {}]
  %s4 = inlined_call_operand.vmem [shape: f32[1,32], index: 4, kind: input, shape index: {}]
  %s5 = inlined_call_operand.vmem [shape: bf16[32,6], index: 5, kind: input, shape index: {}]
  %s6 = inlined_call_operand.vmem [shape: f32[1,6], index: 6, kind: input, shape index: {}]
  %s7 = inlined_call_operand.hbm [shape: f32[2,6], index: 7, kind: output, shape index: {}]
  %s8 = sld [smem:[#allocation0]]
  $region38: #{tpu_custom_call.1} parent=0
    _
  %s10 = ssub.s32 1, %s8
  %s11 = scalar_select 0, %s10, %s8
  $region1: #{tpu_custom_call.1} parent=0
    #allocation2 [shape = 'u8[1024]{0}', space=vmem, size = 0x400, scoped, tag = 'output window, operand 0, single buffered']
    #allocation3 [shape = 's32[1]{0}', space=sflag, size = 0x4, scoped, tag = 'scoped memory for tpu_custom_call.1']
    %12 = vsyncpa [#allocation3], 0
    // Predicated region
    $region2: #{tpu_custom_call.1} parent=1 // pred_check
      _
    $region3: #{tpu_custom_call.1} parent=1 // pred_check_branch
      %14 = sbr.rel (0) target = $region5
    $region4: #{tpu_custom_call.1} parent=1 // pred_region
      _
    $region5: #{tpu_custom_call.1} parent=1 // pred_fallthru
      _
    // Predicated region
    $region6: #{tpu_custom_call.1} parent=1 // pred_check
      _
    $region7: #{tpu_custom_call.1} parent=1 // pred_check_branch
      %16 = sbr.rel (0) target = $region9
    $region8: #{tpu_custom_call.1} parent=1 // pred_region
      _
    $region9: #{tpu_custom_call.1} parent=1 // pred_fallthru
      _
    // Predicated region
    $region10: #{tpu_custom_call.1} parent=1 // pred_check
      _
    $region11: #{tpu_custom_call.1} parent=1 // pred_check_branch
      %18 = sbr.rel (0) target = $region13
    $region12: #{tpu_custom_call.1} parent=1 // pred_region
      _
    $region13: #{tpu_custom_call.1} parent=1 // pred_fallthru
      _
    // Predicated region
    $region14: #{tpu_custom_call.1} parent=1 // pred_check
      _
    $region15: #{tpu_custom_call.1} parent=1 // pred_check_branch
      %20 = sbr.rel (0) target = $region17
    $region16: #{tpu_custom_call.1} parent=1 // pred_region
      _
    $region17: #{tpu_custom_call.1} parent=1 // pred_fallthru
      _
    // Predicated region
    $region18: #{tpu_custom_call.1} parent=1 // pred_check
      _
    $region19: #{tpu_custom_call.1} parent=1 // pred_check_branch
      %22 = sbr.rel (0) target = $region21
    $region20: #{tpu_custom_call.1} parent=1 // pred_region
      _
    $region21: #{tpu_custom_call.1} parent=1 // pred_fallthru
      _
    // Predicated region
    $region22: #{tpu_custom_call.1} parent=1 // pred_check
      _
    $region23: #{tpu_custom_call.1} parent=1 // pred_check_branch
      %24 = sbr.rel (0) target = $region25
    $region24: #{tpu_custom_call.1} parent=1 // pred_region
      _
    $region25: #{tpu_custom_call.1} parent=1 // pred_fallthru
      _
    // Predicated region
    $region26: #{tpu_custom_call.1} parent=1 // pred_check
      _
    $region27: #{tpu_custom_call.1} parent=1 // pred_check_branch
      %26 = sbr.rel (0) target = $region29
    $region28: #{tpu_custom_call.1} parent=1 // pred_region
      _
    $region29: #{tpu_custom_call.1} parent=1 // pred_fallthru
      _
    %v28 = vld [vmem:[%s0] sm:$0x3]
    %v29 = vpack.c.bf16 %v28, %v28
    %v30 = vld [vmem:[%s1] sm:$0xf]
    %v31 = vld [vmem:[%s2] sm:$0x1]
    %v33 = vlaneseq
    %v34 = vshrl.u32 %v33, 7
    %v35 = vsub.s32 0, %v34
    %v36 = vrot.slane %v31, %v35
    %vm38 = vcmask 64512
    %v40 = vsel %vm38, %v29, 0
    %vm42 = vcmask 1043456
    %v44 = vsel %vm42, %v30, 0
    %46 = vmatprep.subr.bf16.mxu0 0
    %47 = vmatpush1.bf16.msra.mxu0 %v44
    %48 = vmatprep.subr.bf16.mxu0 0
    %49 = vmatpush1.bf16.msra.mxu0 0
    %50 = vmatprep.subr.bf16.mxu0 0
    %51 = vmatpush1.bf16.msra.mxu0 0
    %52 = vmatprep.subr.bf16.mxu0 0
    %53 = vmatpush1.bf16.msra.mxu0 0
    %54 = vmatprep.subr.bf16.mxu0 0
    %55 = vmatpush1.bf16.msra.mxu0 0
    %56 = vmatprep.subr.bf16.mxu0 0
    %57 = vmatpush1.bf16.msra.mxu0 0
    %58 = vmatprep.subr.bf16.mxu0 0
    %59 = vmatpush1.bf16.msra.mxu0 0
    %60 = vmatprep.subr.bf16.mxu0 0
    %61 = vmatpush1.bf16.msra.mxu0 0
    %62 = vmatprep.subr.bf16.mxu0 0
    %63 = vmatpush1.bf16.msra.mxu0 0
    %64 = vmatprep.subr.bf16.mxu0 0
    %65 = vmatpush1.bf16.msra.mxu0 0
    %66 = vmatprep.subr.bf16.mxu0 0
    %67 = vmatpush1.bf16.msra.mxu0 0
    %68 = vmatprep.subr.bf16.mxu0 0
    %69 = vmatpush1.bf16.msra.mxu0 0
    %70 = vmatprep.subr.bf16.mxu0 0
    %71 = vmatpush1.bf16.msra.mxu0 0
    %72 = vmatprep.subr.bf16.mxu0 0
    %73 = vmatpush1.bf16.msra.mxu0 0
    %74 = vmatprep.subr.bf16.mxu0 0
    %75 = vmatpush1.bf16.msra.mxu0 0
    %76 = vmatprep.subr.bf16.mxu0 0
    %77 = vmatpush1.bf16.msra.mxu0 0
    %78 = vmatprep.mubr.bf16.mxu0 0
    %79 = vmatmul.mubr.bf16.gmra.mrb[0].mxu0 %v40
    %v80 = vpop.f32.mrb[0].mxu0
    %v81 = vadd.f32 %v36, %v80
    %v82 = vpop.f32.mrb[0].mxu0
    %v83 = vpop.f32.mrb[0].mxu0
    %v84 = vpop.f32.mrb[0].mxu0
    %85 = vdwg.mxu0
    %v86 = vmax.f32 %v81, 0.0
    %v87 = vpack.c.bf16 %v86, %v86
    %v88 = vld [vmem:[%s3] sm:$0xf]
    %v89 = vld [vmem:[%s3 + $0x4] sm:$0xf]
    %v90 = vld [vmem:[%s3 + $0x8] sm:$0xf]
    %v91 = vld [vmem:[%s3 + $0xc] sm:$0xf]
    %v92 = vld [vmem:[%s4] sm:$0x1]
    %v94 = vlaneseq
    %v95 = vshrl.u32 %v94, 7
    %v96 = vsub.s32 0, %v95
    %v97 = vrot.slane %v92, %v96
    %v103 = vunpack.c.l.b16 %v88
    %v104 = vunpack.c.l.b16 %v89
    %v105 = vunpack.c.l.b16 %v90
    %v106 = vunpack.c.l.b16 %v91
    %v107 = vpack.c.b16 %v104, %v103
    %v108 = vpack.c.b16 %v106, %v105
    %vm111 = vcmask 261120
    %v113 = vsel %vm111, %v87, 0
    %115 = vmatprep.subr.bf16.mxu0 0
    %116 = vmatpush1.bf16.msra.mxu0 %v107
    %117 = vmatprep.subr.bf16.mxu0 0
    %118 = vmatpush1.bf16.msra.mxu0 %v108
    %119 = vmatprep.subr.bf16.mxu0 0
    %120 = vmatpush1.bf16.msra.mxu0 0
    %121 = vmatprep.subr.bf16.mxu0 0
    %122 = vmatpush1.bf16.msra.mxu0 0
    %123 = vmatprep.subr.bf16.mxu0 0
    %124 = vmatpush1.bf16.msra.mxu0 0
    %125 = vmatprep.subr.bf16.mxu0 0
    %126 = vmatpush1.bf16.msra.mxu0 0
    %127 = vmatprep.subr.bf16.mxu0 0
    %128 = vmatpush1.bf16.msra.mxu0 0
    %129 = vmatprep.subr.bf16.mxu0 0
    %130 = vmatpush1.bf16.msra.mxu0 0
    %131 = vmatprep.subr.bf16.mxu0 0
    %132 = vmatpush1.bf16.msra.mxu0 0
    %133 = vmatprep.subr.bf16.mxu0 0
    %134 = vmatpush1.bf16.msra.mxu0 0
    %135 = vmatprep.subr.bf16.mxu0 0
    %136 = vmatpush1.bf16.msra.mxu0 0
    %137 = vmatprep.subr.bf16.mxu0 0
    %138 = vmatpush1.bf16.msra.mxu0 0
    %139 = vmatprep.subr.bf16.mxu0 0
    %140 = vmatpush1.bf16.msra.mxu0 0
    %141 = vmatprep.subr.bf16.mxu0 0
    %142 = vmatpush1.bf16.msra.mxu0 0
    %143 = vmatprep.subr.bf16.mxu0 0
    %144 = vmatpush1.bf16.msra.mxu0 0
    %145 = vmatprep.subr.bf16.mxu0 0
    %146 = vmatpush1.bf16.msra.mxu0 0
    %147 = vmatprep.mubr.bf16.mxu0 0
    %148 = vmatmul.mubr.bf16.gmra.mrb[0].mxu0 %v113
    %v149 = vpop.f32.mrb[0].mxu0
    %v150 = vadd.f32 %v97, %v149
    %v151 = vpop.f32.mrb[0].mxu0
    %v152 = vpop.f32.mrb[0].mxu0
    %v153 = vpop.f32.mrb[0].mxu0
    %154 = vdwg.mxu0
    %v155 = vmax.f32 %v150, 0.0
    %v156 = vpack.c.bf16 %v155, %v155
    %v157 = vld [vmem:[%s5] sm:$0xf]
    %v158 = vld [vmem:[%s5 + $0x4] sm:$0xf]
    %v159 = vld [vmem:[%s5 + $0x8] sm:$0xf]
    %v160 = vld [vmem:[%s5 + $0xc] sm:$0xf]
    %v161 = vld [vmem:[%s6] sm:$0x1]
    %v163 = vlaneseq
    %v164 = vshrl.u32 %v163, 7
    %v165 = vsub.s32 0, %v164
    %v166 = vrot.slane %v161, %v165
    %v172 = vunpack.c.l.b16 %v157
    %v173 = vunpack.c.l.b16 %v158
    %v174 = vunpack.c.l.b16 %v159
    %v175 = vunpack.c.l.b16 %v160
    %v176 = vpack.c.b16 %v173, %v172
    %v177 = vpack.c.b16 %v175, %v174
    %v181 = vsel %vm111, %v156, 0
    %183 = vmatprep.subr.bf16.mxu0 0
    %184 = vmatpush1.bf16.msra.mxu0 %v176
    %185 = vmatprep.subr.bf16.mxu0 0
    %186 = vmatpush1.bf16.msra.mxu0 %v177
    %187 = vmatprep.subr.bf16.mxu0 0
    %188 = vmatpush1.bf16.msra.mxu0 0
    %189 = vmatprep.subr.bf16.mxu0 0
    %190 = vmatpush1.bf16.msra.mxu0 0
    %191 = vmatprep.subr.bf16.mxu0 0
    %192 = vmatpush1.bf16.msra.mxu0 0
    %193 = vmatprep.subr.bf16.mxu0 0
    %194 = vmatpush1.bf16.msra.mxu0 0
    %195 = vmatprep.subr.bf16.mxu0 0
    %196 = vmatpush1.bf16.msra.mxu0 0
    %197 = vmatprep.subr.bf16.mxu0 0
    %198 = vmatpush1.bf16.msra.mxu0 0
    %199 = vmatprep.subr.bf16.mxu0 0
    %200 = vmatpush1.bf16.msra.mxu0 0
    %201 = vmatprep.subr.bf16.mxu0 0
    %202 = vmatpush1.bf16.msra.mxu0 0
    %203 = vmatprep.subr.bf16.mxu0 0
    %204 = vmatpush1.bf16.msra.mxu0 0
    %205 = vmatprep.subr.bf16.mxu0 0
    %206 = vmatpush1.bf16.msra.mxu0 0
    %207 = vmatprep.subr.bf16.mxu0 0
    %208 = vmatpush1.bf16.msra.mxu0 0
    %209 = vmatprep.subr.bf16.mxu0 0
    %210 = vmatpush1.bf16.msra.mxu0 0
    %211 = vmatprep.subr.bf16.mxu0 0
    %212 = vmatpush1.bf16.msra.mxu0 0
    %213 = vmatprep.subr.bf16.mxu0 0
    %214 = vmatpush1.bf16.msra.mxu0 0
    %215 = vmatprep.mubr.bf16.mxu0 0
    %216 = vmatmul.mubr.bf16.gmra.mrb[0].mxu0 %v181
    %v217 = vpop.f32.mrb[0].mxu0
    %v218 = vadd.f32 %v166, %v217
    %v219 = vpop.f32.mrb[0].mxu0
    %v220 = vpop.f32.mrb[0].mxu0
    %v221 = vpop.f32.mrb[0].mxu0
    %222 = vdwg.mxu0
    %vm223 = vcmask 41984
    %224 = vst.msk [vmem:[#allocation2] sm:$0x3] %vm223, %v218
    // Predicated region
    $region30: #{tpu_custom_call.1} parent=1 // pred_check
      _
    $region31: #{tpu_custom_call.1} parent=1 // pred_check_branch
      %226 = sbr.rel (0) target = $region33
    $region32: #{tpu_custom_call.1} parent=1 // pred_region
      %s228 = ssub.s32 32, 32
      %229 = vsyncadd [#allocation3], %s228
      %s231 = sshll.u32 [#allocation2], 4
      %s232 = int_to_ptr.vmem [resolvable:$true] %s231
      %234 = dma.vmem_to_hbm [thread:$0]  %s232, 32, %s7, [#allocation3]
    $region33: #{tpu_custom_call.1} parent=1 // pred_fallthru
      _
    // Predicated region
    $region34: #{tpu_custom_call.1} parent=1 // pred_check
      _
    $region35: #{tpu_custom_call.1} parent=1 // pred_check_branch
      %236 = sbr.rel (0) target = $region37
    $region36: #{tpu_custom_call.1} parent=1 // pred_region
      %237 = dma.done [#allocation3], 32
    $region37: #{tpu_custom_call.1} parent=1 // pred_fallthru
      _
    %238 = vsyncpa [#allocation3], 1

</llo_original>
